<compile_context>
chip_gen: v6e
topology: v6e:2x2x1
jax: 0.10.0
libtpu: 0.0.40
codegen_flags: <defaults>
</compile_context>

<pallas_src>
import jax
import jax.numpy as jnp
from jax import lax
from jax.experimental import pallas as pl
from jax.experimental.pallas import tpu as pltpu


HIDDEN = 200         # logical hidden width of la1 / la2 (PyTorch spec)
HIDDEN_PAD = 256     # lane-dense / MXU-aligned padded width
MAX_BATCH_TILE = 512 # rows per grid step for large batches (multiple of 256)


def _round_up(x, m):
    return (x + m - 1) // m * m


# ----------------------------- kernel --------------------------------------


def encode_kernel(ids_ref, t1_ref, b1_ref, w2_ref, b2_ref, out_ref):
    # ids: (Bt, L) int32        t1: (Vp, Hp)  = embed @ W1 (zero-padded)
    # b1:  (1, Hp) f32          w2: (Hp, Hp)  b2: (1, Hp) f32
    # out: (Bt, Hp) f32
    bt, seq_len = ids_ref.shape
    vp = t1_ref.shape[0]

    ids = ids_ref[...]                                              # (Bt, L)
    vocab_iota = lax.broadcasted_iota(jnp.int32, (bt, vp), 1)       # (Bt, Vp)

    # Normalized one-hot counts == mean over the L tokens of one-hot(ids).
    # L is small and static -> unrolled VPU compares, no XLU reduce.
    counts = jnp.zeros((bt, vp), jnp.float32)
    for l in range(seq_len):
        eq = ids[:, l:l + 1] == vocab_iota                          # lane bcast
        counts = counts + jnp.where(eq, 1.0, 0.0)
    counts = counts * (1.0 / seq_len)

    # Layer 1: (Bt, Vp) @ (Vp, Hp) on the MXU, f32 accumulation.
    h1 = jnp.dot(counts.astype(t1_ref.dtype), t1_ref[...],
                 preferred_element_type=jnp.float32)
    h1 = jnp.maximum(h1 + b1_ref[...], 0.0)                         # bias+ReLU

    # Layer 2: (Bt, Hp) @ (Hp, Hp).
    h2 = jnp.dot(h1.astype(w2_ref.dtype), w2_ref[...],
                 preferred_element_type=jnp.float32)
    out_ref[...] = jnp.maximum(h2 + b2_ref[...], 0.0)               # (Bt, Hp)


# ----------------------------- wrappers -------------------------------------


def pad_encode_params(params, compute_dtype=jnp.bfloat16):
    """Fold embed@W1 into one table, zero-pad 200->256 / vocab->128, cast.

    Padded columns/rows are exactly zero, so padded h1 columns stay zero
    through bias-add(0) + ReLU and hit zero rows of W2; padded vocab rows are
    never selected by the one-hot counts.  Run once at init (not per call).
    """
    embed = params["embed"].astype(jnp.float32)
    vocab, _ = embed.shape
    h = params["w1"].shape[1]
    hp = HIDDEN_PAD
    vp = _round_up(vocab, 128)
    assert h <= hp

    w1p = jnp.zeros((embed.shape[1], hp), jnp.float32).at[:, :h].set(params["w1"])
    t1 = jnp.zeros((vp, hp), jnp.float32).at[:vocab, :].set(embed @ w1p)
    b1 = jnp.zeros((1, hp), jnp.float32).at[:, :h].set(params["b1"])
    w2 = jnp.zeros((hp, hp), jnp.float32).at[:h, :h].set(params["w2"])
    b2 = jnp.zeros((1, hp), jnp.float32).at[:, :h].set(params["b2"])
    return {
        "t1": t1.astype(compute_dtype),   # matmul operands in compute dtype
        "b1": b1,                         # biases stay f32 (added to f32 acc)
        "w2": w2.astype(compute_dtype),
        "b2": b2,
    }


def dnn_encode(padded, x_ids, *, hidden=HIDDEN, max_batch_tile=MAX_BATCH_TILE):
    """DnnEncode.forward: ReLU(ReLU(mean_L(embed(x)) @ W1 + b1) @ W2 + b2)."""
    b, seq_len = x_ids.shape
    vp, hp = padded["t1"].shape

    # Batch tiling: one sublane-aligned tile for small batches; 512-row tiles
    # for large ones (multiple of 256 -> MXU-M friendly, and >= 2 "parallel"
    # grid steps so v7x can split the batch across both TensorCores).
    bp8 = _round_up(max(b, 1), 8)
    bt = bp8 if bp8 <= max_batch_tile else max_batch_tile
    bp = _round_up(bp8, bt)

    ids = x_ids.astype(jnp.int32)
    if bp != b:
        ids = jnp.pad(ids, ((0, bp - b), (0, 0)))
    n_blocks = bp // bt

    out = pl.pallas_call(
        encode_kernel,
        out_shape=jax.ShapeDtypeStruct((bp, hp), jnp.float32),
        grid=(n_blocks,),
        in_specs=[
            pl.BlockSpec((bt, seq_len), lambda i: (i, 0)),   # ids tile
            pl.BlockSpec((vp, hp), lambda i: (0, 0)),        # weights: same block
            pl.BlockSpec((1, hp), lambda i: (0, 0)),         # every step -> DMA'd
            pl.BlockSpec((hp, hp), lambda i: (0, 0)),        # once and kept resident
            pl.BlockSpec((1, hp), lambda i: (0, 0)),
        ],
        out_specs=pl.BlockSpec((bt, hp), lambda i: (i, 0)),
        compiler_params=pltpu.CompilerParams(
            dimension_semantics=("parallel",)),              # batch axis -> both TCs
    )(ids, padded["t1"], padded["b1"], padded["w2"], padded["b2"])

    # Strip batch and lane padding back to the logical shape.
    return out[:b, :hidden]


# ----------------------------- param init -----------------------------------


def init_params(key, vocab=50, embed_len=32, hidden=HIDDEN):
    ks = jax.random.split(key, 5)
    scale = 0.1
    return {
        "embed": jax.random.normal(ks[0], (vocab, embed_len), jnp.float32) * scale,
        # la1: Linear(embed_len, 200)  (stored transposed: (in, out))
        "w1": jax.random.normal(ks[1], (embed_len, hidden), jnp.float32) * scale,
        "b1": jax.random.normal(ks[2], (1, hidden), jnp.float32) * scale,
        # la2: Linear(200, 200)
        "w2": jax.random.normal(ks[3], (hidden, hidden), jnp.float32) * scale,
        "b2": jax.random.normal(ks[4], (1, hidden), jnp.float32) * scale,
    }


# ----------------------------- main ------------------------------------------


if __name__ == "__main__":
    key = jax.random.PRNGKey(0)
    kp, kx, kx2 = jax.random.split(key, 3)

    B, L, VOCAB, E = 2, 8, 50, 32
    params = init_params(kp, vocab=VOCAB, embed_len=E, hidden=HIDDEN)
    x_ids = jax.random.randint(kx, (B, L), 0, VOCAB, dtype=jnp.int32)

    # Fold/pad/cast weights once at init, hoisted out of the jitted forward.
    padded_bf16 = pad_encode_params(params, jnp.bfloat16)  # default on all gens
    padded_f32 = pad_encode_params(params, jnp.float32)    # exact-precision path

    fwd = jax.jit(dnn_encode, static_argnames=("hidden", "max_batch_tile"))

    out_bf16 = jax.block_until_ready(fwd(padded_bf16, x_ids))
    out_f32 = jax.block_until_ready(fwd(padded_f32, x_ids))
    assert out_bf16.shape == (B, HIDDEN) and out_bf16.dtype == jnp.float32
    assert out_f32.shape == (B, HIDDEN) and out_f32.dtype == jnp.float32

    # Pure-JAX reference (PyTorch eval-mode semantics).
    def ref_encode(p, ids):
        m = jnp.mean(p["embed"][ids], axis=1)
        h1 = jnp.maximum(m @ p["w1"] + p["b1"], 0.0)
        return jnp.maximum(h1 @ p["w2"] + p["b2"], 0.0)

    ref = ref_encode(params, x_ids)
    assert jnp.allclose(out_f32, ref, atol=1e-3, rtol=1e-3)
    assert jnp.allclose(out_bf16, ref, atol=2e-2, rtol=2e-2)  # bf16 quantization

    # Exercise the multi-block grid + batch-padding path (3 tiles of 8 rows).
    B2 = 20
    x_ids2 = jax.random.randint(kx2, (B2, L), 0, VOCAB, dtype=jnp.int32)
    out2 = jax.block_until_ready(fwd(padded_f32, x_ids2, max_batch_tile=8))
    ref2 = ref_encode(params, x_ids2)
    assert out2.shape == (B2, HIDDEN)
    assert jnp.allclose(out2, ref2, atol=1e-3, rtol=1e-3)

    print("KERNEL_OK")
</pallas_src>

<mosaic_0001>
module attributes {stable_mosaic.version = 11 : i64} {
  func.func @encode_kernel(%arg0: i32, %arg1: memref<8x8xi32, #tpu.memory_space<vmem>>, %arg2: memref<128x256xbf16, #tpu.memory_space<vmem>>, %arg3: memref<1x256xf32, #tpu.memory_space<vmem>>, %arg4: memref<256x256xbf16, #tpu.memory_space<vmem>>, %arg5: memref<1x256xf32, #tpu.memory_space<vmem>>, %arg6: memref<8x256xf32, #tpu.memory_space<vmem>>) attributes {dimension_semantics = [#tpu.dimension_semantics<parallel>], iteration_bounds = array<i64: 1>, scalar_prefetch = 0 : i64, scratch_operands = 0 : i64, tpu.core_type = #tpu.core_type<tc>, window_params = [{transform_indices = @transform_0, window_bounds = array<i64: 8, 8>}, {pipeline_mode = #tpu.pipeline_mode<synchronous>, transform_indices = @transform_1, window_bounds = array<i64: 128, 256>}, {pipeline_mode = #tpu.pipeline_mode<synchronous>, transform_indices = @transform_2, window_bounds = array<i64: 1, 256>}, {pipeline_mode = #tpu.pipeline_mode<synchronous>, transform_indices = @transform_3, window_bounds = array<i64: 256, 256>}, {pipeline_mode = #tpu.pipeline_mode<synchronous>, transform_indices = @transform_4, window_bounds = array<i64: 1, 256>}, {transform_indices = @transform_5, window_bounds = array<i64: 8, 256>}]} {
    %c0 = arith.constant 0 : index
    %c0_0 = arith.constant 0 : index
    %0 = vector.load %arg1[%c0, %c0_0] : memref<8x8xi32, #tpu.memory_space<vmem>>, vector<8x8xi32>
    %1 = tpu.iota {dimensions = array<i32: 1>} : vector<8x128xi32>
    %cst = arith.constant 0.000000e+00 : f32
    %2 = vector.broadcast %cst : f32 to vector<8x128xf32>
    %3 = vector.extract_strided_slice %0 {offsets = [0, 0], sizes = [8, 1], strides = [1, 1]} : vector<8x8xi32> to vector<8x1xi32>
    %4 = vector.broadcast %3 : vector<8x1xi32> to vector<8x128xi32>
    %5 = arith.cmpi eq, %4, %1 : vector<8x128xi32>
    %cst_1 = arith.constant 1.000000e+00 : f32
    %cst_2 = arith.constant 0.000000e+00 : f32
    %6 = vector.broadcast %cst_1 : f32 to vector<8x128xf32>
    %7 = vector.broadcast %cst_2 : f32 to vector<8x128xf32>
    %8 = arith.select %5, %6, %7 : vector<8x128xi1>, vector<8x128xf32>
    %9 = arith.addf %2, %8 : vector<8x128xf32>
    %10 = vector.extract_strided_slice %0 {offsets = [0, 1], sizes = [8, 1], strides = [1, 1]} : vector<8x8xi32> to vector<8x1xi32>
    %11 = vector.broadcast %10 : vector<8x1xi32> to vector<8x128xi32>
    %12 = arith.cmpi eq, %11, %1 : vector<8x128xi32>
    %cst_3 = arith.constant 1.000000e+00 : f32
    %cst_4 = arith.constant 0.000000e+00 : f32
    %13 = vector.broadcast %cst_3 : f32 to vector<8x128xf32>
    %14 = vector.broadcast %cst_4 : f32 to vector<8x128xf32>
    %15 = arith.select %12, %13, %14 : vector<8x128xi1>, vector<8x128xf32>
    %16 = arith.addf %9, %15 : vector<8x128xf32>
    %17 = vector.extract_strided_slice %0 {offsets = [0, 2], sizes = [8, 1], strides = [1, 1]} : vector<8x8xi32> to vector<8x1xi32>
    %18 = vector.broadcast %17 : vector<8x1xi32> to vector<8x128xi32>
    %19 = arith.cmpi eq, %18, %1 : vector<8x128xi32>
    %cst_5 = arith.constant 1.000000e+00 : f32
    %cst_6 = arith.constant 0.000000e+00 : f32
    %20 = vector.broadcast %cst_5 : f32 to vector<8x128xf32>
    %21 = vector.broadcast %cst_6 : f32 to vector<8x128xf32>
    %22 = arith.select %19, %20, %21 : vector<8x128xi1>, vector<8x128xf32>
    %23 = arith.addf %16, %22 : vector<8x128xf32>
    %24 = vector.extract_strided_slice %0 {offsets = [0, 3], sizes = [8, 1], strides = [1, 1]} : vector<8x8xi32> to vector<8x1xi32>
    %25 = vector.broadcast %24 : vector<8x1xi32> to vector<8x128xi32>
    %26 = arith.cmpi eq, %25, %1 : vector<8x128xi32>
    %cst_7 = arith.constant 1.000000e+00 : f32
    %cst_8 = arith.constant 0.000000e+00 : f32
    %27 = vector.broadcast %cst_7 : f32 to vector<8x128xf32>
    %28 = vector.broadcast %cst_8 : f32 to vector<8x128xf32>
    %29 = arith.select %26, %27, %28 : vector<8x128xi1>, vector<8x128xf32>
    %30 = arith.addf %23, %29 : vector<8x128xf32>
    %31 = vector.extract_strided_slice %0 {offsets = [0, 4], sizes = [8, 1], strides = [1, 1]} : vector<8x8xi32> to vector<8x1xi32>
    %32 = vector.broadcast %31 : vector<8x1xi32> to vector<8x128xi32>
    %33 = arith.cmpi eq, %32, %1 : vector<8x128xi32>
    %cst_9 = arith.constant 1.000000e+00 : f32
    %cst_10 = arith.constant 0.000000e+00 : f32
    %34 = vector.broadcast %cst_9 : f32 to vector<8x128xf32>
    %35 = vector.broadcast %cst_10 : f32 to vector<8x128xf32>
    %36 = arith.select %33, %34, %35 : vector<8x128xi1>, vector<8x128xf32>
    %37 = arith.addf %30, %36 : vector<8x128xf32>
    %38 = vector.extract_strided_slice %0 {offsets = [0, 5], sizes = [8, 1], strides = [1, 1]} : vector<8x8xi32> to vector<8x1xi32>
    %39 = vector.broadcast %38 : vector<8x1xi32> to vector<8x128xi32>
    %40 = arith.cmpi eq, %39, %1 : vector<8x128xi32>
    %cst_11 = arith.constant 1.000000e+00 : f32
    %cst_12 = arith.constant 0.000000e+00 : f32
    %41 = vector.broadcast %cst_11 : f32 to vector<8x128xf32>
    %42 = vector.broadcast %cst_12 : f32 to vector<8x128xf32>
    %43 = arith.select %40, %41, %42 : vector<8x128xi1>, vector<8x128xf32>
    %44 = arith.addf %37, %43 : vector<8x128xf32>
    %45 = vector.extract_strided_slice %0 {offsets = [0, 6], sizes = [8, 1], strides = [1, 1]} : vector<8x8xi32> to vector<8x1xi32>
    %46 = vector.broadcast %45 : vector<8x1xi32> to vector<8x128xi32>
    %47 = arith.cmpi eq, %46, %1 : vector<8x128xi32>
    %cst_13 = arith.constant 1.000000e+00 : f32
    %cst_14 = arith.constant 0.000000e+00 : f32
    %48 = vector.broadcast %cst_13 : f32 to vector<8x128xf32>
    %49 = vector.broadcast %cst_14 : f32 to vector<8x128xf32>
    %50 = arith.select %47, %48, %49 : vector<8x128xi1>, vector<8x128xf32>
    %51 = arith.addf %44, %50 : vector<8x128xf32>
    %52 = vector.extract_strided_slice %0 {offsets = [0, 7], sizes = [8, 1], strides = [1, 1]} : vector<8x8xi32> to vector<8x1xi32>
    %53 = vector.broadcast %52 : vector<8x1xi32> to vector<8x128xi32>
    %54 = arith.cmpi eq, %53, %1 : vector<8x128xi32>
    %cst_15 = arith.constant 1.000000e+00 : f32
    %cst_16 = arith.constant 0.000000e+00 : f32
    %55 = vector.broadcast %cst_15 : f32 to vector<8x128xf32>
    %56 = vector.broadcast %cst_16 : f32 to vector<8x128xf32>
    %57 = arith.select %54, %55, %56 : vector<8x128xi1>, vector<8x128xf32>
    %58 = arith.addf %51, %57 : vector<8x128xf32>
    %cst_17 = arith.constant 1.250000e-01 : f32
    %59 = vector.broadcast %cst_17 : f32 to vector<8x128xf32>
    %60 = arith.mulf %58, %59 : vector<8x128xf32>
    %61 = arith.truncf %60 : vector<8x128xf32> to vector<8x128xbf16>
    %c0_18 = arith.constant 0 : index
    %c0_19 = arith.constant 0 : index
    %62 = vector.load %arg2[%c0_18, %c0_19] : memref<128x256xbf16, #tpu.memory_space<vmem>>, vector<128x256xbf16>
    %cst_20 = arith.constant dense<0.000000e+00> : vector<8x256xf32>
    %63 = tpu.matmul %61, %62, %cst_20 {dimension_numbers = #tpu.dot_dimension_numbers<[1], [0], [0], [1], [0, 0, 1, 1], [], []>} : vector<8x128xbf16>, vector<128x256xbf16>, vector<8x256xf32> -> vector<8x256xf32>
    %c0_21 = arith.constant 0 : index
    %c0_22 = arith.constant 0 : index
    %64 = vector.load %arg3[%c0_21, %c0_22] : memref<1x256xf32, #tpu.memory_space<vmem>>, vector<1x256xf32>
    %65 = vector.broadcast %64 : vector<1x256xf32> to vector<8x256xf32>
    %66 = arith.addf %63, %65 : vector<8x256xf32>
    %cst_23 = arith.constant 0.000000e+00 : f32
    %67 = vector.broadcast %cst_23 : f32 to vector<8x256xf32>
    %68 = arith.maximumf %66, %67 : vector<8x256xf32>
    %69 = arith.truncf %68 : vector<8x256xf32> to vector<8x256xbf16>
    %c0_24 = arith.constant 0 : index
    %c0_25 = arith.constant 0 : index
    %70 = vector.load %arg4[%c0_24, %c0_25] : memref<256x256xbf16, #tpu.memory_space<vmem>>, vector<256x256xbf16>
    %cst_26 = arith.constant dense<0.000000e+00> : vector<8x256xf32>
    %71 = tpu.matmul %69, %70, %cst_26 {dimension_numbers = #tpu.dot_dimension_numbers<[1], [0], [0], [1], [0, 0, 1, 1], [], []>} : vector<8x256xbf16>, vector<256x256xbf16>, vector<8x256xf32> -> vector<8x256xf32>
    %c0_27 = arith.constant 0 : index
    %c0_28 = arith.constant 0 : index
    %72 = vector.load %arg5[%c0_27, %c0_28] : memref<1x256xf32, #tpu.memory_space<vmem>>, vector<1x256xf32>
    %73 = vector.broadcast %72 : vector<1x256xf32> to vector<8x256xf32>
    %74 = arith.addf %71, %73 : vector<8x256xf32>
    %cst_29 = arith.constant 0.000000e+00 : f32
    %75 = vector.broadcast %cst_29 : f32 to vector<8x256xf32>
    %76 = arith.maximumf %74, %75 : vector<8x256xf32>
    %c0_30 = arith.constant 0 : index
    %c0_31 = arith.constant 0 : index
    %77 = vector.load %arg6[%c0_30, %c0_31] : memref<8x256xf32, #tpu.memory_space<vmem>>, vector<8x256xf32>
    tpu.vector_store %arg6[%c0_30, %c0_31], %76 {strides = array<i32>} : memref<8x256xf32, #tpu.memory_space<vmem>>, vector<8x256xf32>,
    return
  }
  func.func @transform_0(%arg0: i32) -> (i32, i32) {
    %c0_i32 = arith.constant 0 : i32
    %c0_i32_0 = arith.constant 0 : i32
    return %arg0, %c0_i32 : i32, i32
  }
  func.func @transform_1(%arg0: i32) -> (i32, i32) {
    %c0_i32 = arith.constant 0 : i32
    %c0_i32_0 = arith.constant 0 : i32
    %c0_i32_1 = arith.constant 0 : i32
    return %c0_i32, %c0_i32_0 : i32, i32
  }
  func.func @transform_2(%arg0: i32) -> (i32, i32) {
    %c0_i32 = arith.constant 0 : i32
    %c0_i32_0 = arith.constant 0 : i32
    %c0_i32_1 = arith.constant 0 : i32
    return %c0_i32, %c0_i32_0 : i32, i32
  }
  func.func @transform_3(%arg0: i32) -> (i32, i32) {
    %c0_i32 = arith.constant 0 : i32
    %c0_i32_0 = arith.constant 0 : i32
    %c0_i32_1 = arith.constant 0 : i32
    return %c0_i32, %c0_i32_0 : i32, i32
  }
  func.func @transform_4(%arg0: i32) -> (i32, i32) {
    %c0_i32 = arith.constant 0 : i32
    %c0_i32_0 = arith.constant 0 : i32
    %c0_i32_1 = arith.constant 0 : i32
    return %c0_i32, %c0_i32_0 : i32, i32
  }
  func.func @transform_5(%arg0: i32) -> (i32, i32) {
    %c0_i32 = arith.constant 0 : i32
    %c0_i32_0 = arith.constant 0 : i32
    return %arg0, %c0_i32 : i32, i32
  }
}

</mosaic_0001>

<llo_original>
// kernel: dnn_encode.1
$region0: #{dnn_encode.1}
  #allocation0 [shape = 'u32[]', space=smem, size = 0x4, offset = 0x4, fixed_abs, tag = 'smem constant byte address 0x4 - core index']
  #allocation1 [shape = 'u32[144,128]{1,0:T(1,128)}', space=vmem, size = 0x12000, scoped, tag = 'internal scratch']
  %s0 = inlined_call_operand.vmem [shape: s32[8,8], index: 0, kind: input, shape index: {}]
  %s1 = inlined_call_operand.hbm [shape: bf16[128,256], index: 1, kind: input, shape index: {}]
  %s2 = inlined_call_operand.vmem [shape: f32[1,256], index: 2, kind: input, shape index: {}]
  %s3 = inlined_call_operand.hbm [shape: bf16[256,256], index: 3, kind: input, shape index: {}]
  %s4 = inlined_call_operand.vmem [shape: f32[1,256], index: 4, kind: input, shape index: {}]
  %s5 = inlined_call_operand.vmem [shape: f32[8,256], index: 5, kind: output, shape index: {}]
  %s6 = sld [smem:[#allocation0]]
  $region38: #{dnn_encode.1} parent=0
    _
  %s8 = ssub.s32 1, %s6
  %s9 = scalar_select 0, %s8, %s6
  $region1: #{dnn_encode.1} parent=0
    #allocation2 [shape = 'u8[65536]{0}', space=vmem, size = 0x10000, scoped, tag = 'input window, operand 1, single buffered']
    #allocation3 [shape = 's32[1]{0}', space=sflag, size = 0x4, scoped, tag = 'scoped memory for dnn_encode.1']
    #allocation4 [shape = 'u8[131072]{0}', space=vmem, size = 0x20000, scoped, tag = 'input window, operand 3, single buffered']
    #allocation5 [shape = 's32[1]{0}', space=sflag, size = 0x4, scoped, tag = 'scoped memory for dnn_encode.1']
    %10 = vsyncpa [#allocation3], 0
    %11 = vsyncpa [#allocation5], 0
    // Predicated region
    $region2: #{dnn_encode.1} parent=1 // pred_check
      _
    $region3: #{dnn_encode.1} parent=1 // pred_check_branch
      %13 = sbr.rel (0) target = $region5
    $region4: #{dnn_encode.1} parent=1 // pred_region
      _
    $region5: #{dnn_encode.1} parent=1 // pred_fallthru
      _
    // Predicated region
    $region6: #{dnn_encode.1} parent=1 // pred_check
      _
    $region7: #{dnn_encode.1} parent=1 // pred_check_branch
      %15 = sbr.rel (0) target = $region9
    $region8: #{dnn_encode.1} parent=1 // pred_region
      %s17 = ssub.s32 2048, 2048
      %18 = vsyncadd [#allocation3], %s17
      %s19 = sshll.u32 [#allocation2], 4
      %s20 = int_to_ptr.vmem [resolvable:$true] %s19
      %25 = dma.hbm_to_vmem [thread:$0]  %s1, 2048, %s20, [#allocation3], 128, 128, 8
    $region9: #{dnn_encode.1} parent=1 // pred_fallthru
      _
    // Predicated region
    $region10: #{dnn_encode.1} parent=1 // pred_check
      _
    $region11: #{dnn_encode.1} parent=1 // pred_check_branch
      %27 = sbr.rel (0) target = $region13
    $region12: #{dnn_encode.1} parent=1 // pred_region
      _
    $region13: #{dnn_encode.1} parent=1 // pred_fallthru
      _
    // Predicated region
    $region14: #{dnn_encode.1} parent=1 // pred_check
      _
    $region15: #{dnn_encode.1} parent=1 // pred_check_branch
      %29 = sbr.rel (0) target = $region17
    $region16: #{dnn_encode.1} parent=1 // pred_region
      %s31 = ssub.s32 4096, 4096
      %32 = vsyncadd [#allocation5], %s31
      %s33 = sshll.u32 [#allocation4], 4
      %s34 = int_to_ptr.vmem [resolvable:$true] %s33
      %39 = dma.hbm_to_vmem [thread:$0]  %s3, 4096, %s34, [#allocation5], 128, 128, 8
    $region17: #{dnn_encode.1} parent=1 // pred_fallthru
      _
    // Predicated region
    $region18: #{dnn_encode.1} parent=1 // pred_check
      _
    $region19: #{dnn_encode.1} parent=1 // pred_check_branch
      %41 = sbr.rel (0) target = $region21
    $region20: #{dnn_encode.1} parent=1 // pred_region
      _
    $region21: #{dnn_encode.1} parent=1 // pred_fallthru
      _
    // Predicated region
    $region22: #{dnn_encode.1} parent=1 // pred_check
      _
    $region23: #{dnn_encode.1} parent=1 // pred_check_branch
      %43 = sbr.rel (0) target = $region25
    $region24: #{dnn_encode.1} parent=1 // pred_region
      %44 = dma.done [#allocation3], 2048
    $region25: #{dnn_encode.1} parent=1 // pred_fallthru
      _
    // Predicated region
    $region26: #{dnn_encode.1} parent=1 // pred_check
      _
    $region27: #{dnn_encode.1} parent=1 // pred_check_branch
      %46 = sbr.rel (0) target = $region29
    $region28: #{dnn_encode.1} parent=1 // pred_region
      %47 = dma.done [#allocation5], 4096
    $region29: #{dnn_encode.1} parent=1 // pred_fallthru
      _
    %v49 = vld [vmem:[%s0] sm:$0xff]
    %v50 = vlaneseq
    %v51 = vand.u32 %v50, 127
    %52 = vset.pattern.permute.xlu0 0
    %53 = vperm.xlu0 %52, %v49
    %v54 = vpop.permute.xlu0 %53
    %vm55 = vcmp.eq.s32.totalorder %v54, %v51
    %v56 = vsel %vm55, 1.0, 0.0
    %v57 = vadd.f32 %v56, 0.0
    %58 = vset.pattern.permute.xlu0 1
    %59 = vperm.xlu0 %58, %v49
    %v60 = vpop.permute.xlu0 %59
    %vm61 = vcmp.eq.s32.totalorder %v60, %v51
    %v62 = vsel %vm61, 1.0, 0.0
    %v63 = vadd.f32 %v57, %v62
    %64 = vset.pattern.permute.xlu0 2
    %65 = vperm.xlu0 %64, %v49
    %v66 = vpop.permute.xlu0 %65
    %vm67 = vcmp.eq.s32.totalorder %v66, %v51
    %v68 = vsel %vm67, 1.0, 0.0
    %v69 = vadd.f32 %v63, %v68
    %70 = vset.pattern.permute.xlu0 3
    %71 = vperm.xlu0 %70, %v49
    %v72 = vpop.permute.xlu0 %71
    %vm73 = vcmp.eq.s32.totalorder %v72, %v51
    %v74 = vsel %vm73, 1.0, 0.0
    %v75 = vadd.f32 %v69, %v74
    %76 = vset.pattern.permute.xlu0 4
    %77 = vperm.xlu0 %76, %v49
    %v78 = vpop.permute.xlu0 %77
    %vm79 = vcmp.eq.s32.totalorder %v78, %v51
    %v80 = vsel %vm79, 1.0, 0.0
    %v81 = vadd.f32 %v75, %v80
    %82 = vset.pattern.permute.xlu0 5
    %83 = vperm.xlu0 %82, %v49
    %v84 = vpop.permute.xlu0 %83
    %vm85 = vcmp.eq.s32.totalorder %v84, %v51
    %v86 = vsel %vm85, 1.0, 0.0
    %v87 = vadd.f32 %v81, %v86
    %88 = vset.pattern.permute.xlu0 6
    %89 = vperm.xlu0 %88, %v49
    %v90 = vpop.permute.xlu0 %89
    %vm91 = vcmp.eq.s32.totalorder %v90, %v51
    %v92 = vsel %vm91, 1.0, 0.0
    %v93 = vadd.f32 %v87, %v92
    %94 = vset.pattern.permute.xlu0 7
    %95 = vperm.xlu0 %94, %v49
    %v96 = vpop.permute.xlu0 %95
    %vm97 = vcmp.eq.s32.totalorder %v96, %v51
    %v98 = vsel %vm97, 1.0, 0.0
    %v99 = vadd.f32 %v93, %v98
    %v100 = vmul.f32 %v99, 0.125
    %v101 = vpack.c.bf16 %v100, %v100
    %v102 = vld [vmem:[#allocation2] sm:$0xff]
    %v103 = vld [vmem:[#allocation2 + $0x8] sm:$0xff]
    %v104 = vld [vmem:[#allocation2 + $0x10] sm:$0xff]
    %v105 = vld [vmem:[#allocation2 + $0x18] sm:$0xff]
    %v106 = vld [vmem:[#allocation2 + $0x20] sm:$0xff]
    %v107 = vld [vmem:[#allocation2 + $0x28] sm:$0xff]
    %v108 = vld [vmem:[#allocation2 + $0x30] sm:$0xff]
    %v109 = vld [vmem:[#allocation2 + $0x38] sm:$0xff]
    %v110 = vld [vmem:[#allocation2 + $0x40] sm:$0xff]
    %v111 = vld [vmem:[#allocation2 + $0x48] sm:$0xff]
    %v112 = vld [vmem:[#allocation2 + $0x50] sm:$0xff]
    %v113 = vld [vmem:[#allocation2 + $0x58] sm:$0xff]
    %v114 = vld [vmem:[#allocation2 + $0x60] sm:$0xff]
    %v115 = vld [vmem:[#allocation2 + $0x68] sm:$0xff]
    %v116 = vld [vmem:[#allocation2 + $0x70] sm:$0xff]
    %v117 = vld [vmem:[#allocation2 + $0x78] sm:$0xff]
    %v118 = vld [vmem:[%s2] sm:$0x3]
    %v120 = vlaneseq
    %v121 = vshrl.u32 %v120, 7
    %v122 = vsub.s32 0, %v121
    %v123 = vrot.slane %v118, %v122
    %v124 = vlaneseq
    %v125 = vshrl.u32 %v124, 7
    %v126 = vsub.s32 1, %v125
    %v127 = vrot.slane %v118, %v126
    %v146 = vunpack.c.l.b16 %v102
    %v147 = vunpack.c.h.b16 %v102
    %v148 = vunpack.c.l.b16 %v103
    %v149 = vunpack.c.h.b16 %v103
    %v150 = vunpack.c.l.b16 %v104
    %v151 = vunpack.c.h.b16 %v104
    %v152 = vunpack.c.l.b16 %v105
    %v153 = vunpack.c.h.b16 %v105
    %v154 = vunpack.c.l.b16 %v106
    %v155 = vunpack.c.h.b16 %v106
    %v156 = vunpack.c.l.b16 %v107
    %v157 = vunpack.c.h.b16 %v107
    %v158 = vunpack.c.l.b16 %v108
    %v159 = vunpack.c.h.b16 %v108
    %v160 = vunpack.c.l.b16 %v109
    %v161 = vunpack.c.h.b16 %v109
    %v162 = vunpack.c.l.b16 %v110
    %v163 = vunpack.c.h.b16 %v110
    %v164 = vunpack.c.l.b16 %v111
    %v165 = vunpack.c.h.b16 %v111
    %v166 = vunpack.c.l.b16 %v112
    %v167 = vunpack.c.h.b16 %v112
    %v168 = vunpack.c.l.b16 %v113
    %v169 = vunpack.c.h.b16 %v113
    %v170 = vunpack.c.l.b16 %v114
    %v171 = vunpack.c.h.b16 %v114
    %v172 = vunpack.c.l.b16 %v115
    %v173 = vunpack.c.h.b16 %v115
    %v174 = vunpack.c.l.b16 %v116
    %v175 = vunpack.c.h.b16 %v116
    %v176 = vunpack.c.l.b16 %v117
    %v177 = vunpack.c.h.b16 %v117
    %v178 = vpack.c.b16 %v148, %v146
    %v179 = vpack.c.b16 %v149, %v147
    %v180 = vpack.c.b16 %v152, %v150
    %v181 = vpack.c.b16 %v153, %v151
    %v182 = vpack.c.b16 %v156, %v154
    %v183 = vpack.c.b16 %v157, %v155
    %v184 = vpack.c.b16 %v160, %v158
    %v185 = vpack.c.b16 %v161, %v159
    %v186 = vpack.c.b16 %v164, %v162
    %v187 = vpack.c.b16 %v165, %v163
    %v188 = vpack.c.b16 %v168, %v166
    %v189 = vpack.c.b16 %v169, %v167
    %v190 = vpack.c.b16 %v172, %v170
    %v191 = vpack.c.b16 %v173, %v171
    %v192 = vpack.c.b16 %v176, %v174
    %v193 = vpack.c.b16 %v177, %v175
    %210 = vmatprep.subr.bf16.mxu0 %v193
    %211 = vmatpush1.bf16.msra.mxu0 %v192
    %212 = vmatprep.subr.bf16.mxu0 %v191
    %213 = vmatpush1.bf16.msra.mxu0 %v190
    %214 = vmatprep.subr.bf16.mxu0 %v189
    %215 = vmatpush1.bf16.msra.mxu0 %v188
    %216 = vmatprep.subr.bf16.mxu0 %v187
    %217 = vmatpush1.bf16.msra.mxu0 %v186
    %218 = vmatprep.subr.bf16.mxu0 %v185
    %219 = vmatpush1.bf16.msra.mxu0 %v184
    %220 = vmatprep.subr.bf16.mxu0 %v183
    %221 = vmatpush1.bf16.msra.mxu0 %v182
    %222 = vmatprep.subr.bf16.mxu0 %v181
    %223 = vmatpush1.bf16.msra.mxu0 %v180
    %224 = vmatprep.subr.bf16.mxu0 %v179
    %225 = vmatpush1.bf16.msra.mxu0 %v178
    %226 = vmatprep.subr.bf16.mxu0 0
    %227 = vmatpush2.bf16.msra.mxu0 0
    %228 = vmatprep.subr.bf16.mxu0 0
    %229 = vmatpush2.bf16.msra.mxu0 0
    %230 = vmatprep.subr.bf16.mxu0 0
    %231 = vmatpush2.bf16.msra.mxu0 0
    %232 = vmatprep.subr.bf16.mxu0 0
    %233 = vmatpush2.bf16.msra.mxu0 0
    %234 = vmatprep.subr.bf16.mxu0 0
    %235 = vmatpush2.bf16.msra.mxu0 0
    %236 = vmatprep.subr.bf16.mxu0 0
    %237 = vmatpush2.bf16.msra.mxu0 0
    %238 = vmatprep.subr.bf16.mxu0 0
    %239 = vmatpush2.bf16.msra.mxu0 0
    %240 = vmatprep.subr.bf16.mxu0 0
    %241 = vmatpush2.bf16.msra.mxu0 0
    %242 = vmatprep.mubr.bf16.mxu0 0
    %243 = vmatmul.mubr.bf16.gmra.mxu0 %v101
    %v244 = vpop.f32.mrf.mxu0
    %v245 = vadd.f32 %v123, %v244
    %v246 = vpop.f32.mrf.mxu0
    %v247 = vadd.f32 %v127, %v246
    %v248 = vpop.f32.mrf.mxu0
    %v249 = vpop.f32.mrf.mxu0
    %250 = vdwg.mxu0
    %v251 = vmax.f32 %v245, 0.0
    %v252 = vmax.f32 %v247, 0.0
    %v253 = vpack.c.bf16 %v251, %v251
    %v254 = vpack.c.bf16 %v252, %v252
    %v255 = vld [vmem:[#allocation4] sm:$0xff]
    %v256 = vld [vmem:[#allocation4 + $0x8] sm:$0xff]
    %v257 = vld [vmem:[#allocation4 + $0x10] sm:$0xff]
    %v258 = vld [vmem:[#allocation4 + $0x18] sm:$0xff]
    %v259 = vld [vmem:[#allocation4 + $0x20] sm:$0xff]
    %v260 = vld [vmem:[#allocation4 + $0x28] sm:$0xff]
    %v261 = vld [vmem:[#allocation4 + $0x30] sm:$0xff]
    %v262 = vld [vmem:[#allocation4 + $0x38] sm:$0xff]
    %v263 = vld [vmem:[#allocation4 + $0x40] sm:$0xff]
    %v264 = vld [vmem:[#allocation4 + $0x48] sm:$0xff]
    %v265 = vld [vmem:[#allocation4 + $0x50] sm:$0xff]
    %v266 = vld [vmem:[#allocation4 + $0x58] sm:$0xff]
    %v267 = vld [vmem:[#allocation4 + $0x60] sm:$0xff]
    %v268 = vld [vmem:[#allocation4 + $0x68] sm:$0xff]
    %v269 = vld [vmem:[#allocation4 + $0x70] sm:$0xff]
    %v270 = vld [vmem:[#allocation4 + $0x78] sm:$0xff]
    %v271 = vld [vmem:[#allocation4 + $0x80] sm:$0xff]
    %v272 = vld [vmem:[#allocation4 + $0x88] sm:$0xff]
    %v273 = vld [vmem:[#allocation4 + $0x90] sm:$0xff]
    %v274 = vld [vmem:[#allocation4 + $0x98] sm:$0xff]
    %v275 = vld [vmem:[#allocation4 + $0xa0] sm:$0xff]
    %v276 = vld [vmem:[#allocation4 + $0xa8] sm:$0xff]
    %v277 = vld [vmem:[#allocation4 + $0xb0] sm:$0xff]
    %v278 = vld [vmem:[#allocation4 + $0xb8] sm:$0xff]
    %v279 = vld [vmem:[#allocation4 + $0xc0] sm:$0xff]
    %v280 = vld [vmem:[#allocation4 + $0xc8] sm:$0xff]
    %v281 = vld [vmem:[#allocation4 + $0xd0] sm:$0xff]
    %v282 = vld [vmem:[#allocation4 + $0xd8] sm:$0xff]
    %v283 = vld [vmem:[#allocation4 + $0xe0] sm:$0xff]
    %v284 = vld [vmem:[#allocation4 + $0xe8] sm:$0xff]
    %v285 = vld [vmem:[#allocation4 + $0xf0] sm:$0xff]
    %v286 = vld [vmem:[#allocation4 + $0xf8] sm:$0xff]
    %v287 = vld [vmem:[%s4] sm:$0x3]
    %v289 = vlaneseq
    %v290 = vshrl.u32 %v289, 7
    %v291 = vsub.s32 0, %v290
    %v292 = vrot.slane %v287, %v291
    %v293 = vlaneseq
    %v294 = vshrl.u32 %v293, 7
    %v295 = vsub.s32 1, %v294
    %v296 = vrot.slane %v287, %v295
    %v331 = vunpack.c.l.b16 %v255
    %v332 = vunpack.c.h.b16 %v255
    %v333 = vunpack.c.l.b16 %v256
    %v334 = vunpack.c.h.b16 %v256
    %v335 = vunpack.c.l.b16 %v257
    %v336 = vunpack.c.h.b16 %v257
    %v337 = vunpack.c.l.b16 %v258
    %v338 = vunpack.c.h.b16 %v258
    %v339 = vunpack.c.l.b16 %v259
    %v340 = vunpack.c.h.b16 %v259
    %v341 = vunpack.c.l.b16 %v260
    %v342 = vunpack.c.h.b16 %v260
    %v343 = vunpack.c.l.b16 %v261
    %v344 = vunpack.c.h.b16 %v261
    %v345 = vunpack.c.l.b16 %v262
    %v346 = vunpack.c.h.b16 %v262
    %v347 = vunpack.c.l.b16 %v263
    %v348 = vunpack.c.h.b16 %v263
    %v349 = vunpack.c.l.b16 %v264
    %v350 = vunpack.c.h.b16 %v264
    %v351 = vunpack.c.l.b16 %v265
    %v352 = vunpack.c.h.b16 %v265
    %v353 = vunpack.c.l.b16 %v266
    %v354 = vunpack.c.h.b16 %v266
    %v355 = vunpack.c.l.b16 %v267
    %v356 = vunpack.c.h.b16 %v267
    %v357 = vunpack.c.l.b16 %v268
    %v358 = vunpack.c.h.b16 %v268
    %v359 = vunpack.c.l.b16 %v269
    %v360 = vunpack.c.h.b16 %v269
    %v361 = vunpack.c.l.b16 %v270
    %v362 = vunpack.c.h.b16 %v270
    %v363 = vunpack.c.l.b16 %v271
    %v364 = vunpack.c.h.b16 %v271
    %v365 = vunpack.c.l.b16 %v272
    %v366 = vunpack.c.h.b16 %v272
    %v367 = vunpack.c.l.b16 %v273
    %v368 = vunpack.c.h.b16 %v273
    %v369 = vunpack.c.l.b16 %v274
    %v370 = vunpack.c.h.b16 %v274
    %v371 = vunpack.c.l.b16 %v275
    %v372 = vunpack.c.h.b16 %v275
    %v373 = vunpack.c.l.b16 %v276
    %v374 = vunpack.c.h.b16 %v276
    %v375 = vunpack.c.l.b16 %v277
    %v376 = vunpack.c.h.b16 %v277
    %v377 = vunpack.c.l.b16 %v278
    %v378 = vunpack.c.h.b16 %v278
    %v379 = vunpack.c.l.b16 %v279
    %v380 = vunpack.c.h.b16 %v279
    %v381 = vunpack.c.l.b16 %v280
    %v382 = vunpack.c.h.b16 %v280
    %v383 = vunpack.c.l.b16 %v281
    %v384 = vunpack.c.h.b16 %v281
    %v385 = vunpack.c.l.b16 %v282
    %v386 = vunpack.c.h.b16 %v282
    %v387 = vunpack.c.l.b16 %v283
    %v388 = vunpack.c.h.b16 %v283
    %v389 = vunpack.c.l.b16 %v284
    %v390 = vunpack.c.h.b16 %v284
    %v391 = vunpack.c.l.b16 %v285
    %v392 = vunpack.c.h.b16 %v285
    %v393 = vunpack.c.l.b16 %v286
    %v394 = vunpack.c.h.b16 %v286
    %v395 = vpack.c.b16 %v333, %v331
    %v396 = vpack.c.b16 %v334, %v332
    %v397 = vpack.c.b16 %v337, %v335
    %v398 = vpack.c.b16 %v338, %v336
    %v399 = vpack.c.b16 %v341, %v339
    %v400 = vpack.c.b16 %v342, %v340
    %v401 = vpack.c.b16 %v345, %v343
    %v402 = vpack.c.b16 %v346, %v344
    %v403 = vpack.c.b16 %v349, %v347
    %v404 = vpack.c.b16 %v350, %v348
    %v405 = vpack.c.b16 %v353, %v351
    %v406 = vpack.c.b16 %v354, %v352
    %v407 = vpack.c.b16 %v357, %v355
    %v408 = vpack.c.b16 %v358, %v356
    %v409 = vpack.c.b16 %v361, %v359
    %v410 = vpack.c.b16 %v362, %v360
    %v411 = vpack.c.b16 %v365, %v363
    %v412 = vpack.c.b16 %v366, %v364
    %v413 = vpack.c.b16 %v369, %v367
    %v414 = vpack.c.b16 %v370, %v368
    %v415 = vpack.c.b16 %v373, %v371
    %v416 = vpack.c.b16 %v374, %v372
    %v417 = vpack.c.b16 %v377, %v375
    %v418 = vpack.c.b16 %v378, %v376
    %v419 = vpack.c.b16 %v381, %v379
    %v420 = vpack.c.b16 %v382, %v380
    %v421 = vpack.c.b16 %v385, %v383
    %v422 = vpack.c.b16 %v386, %v384
    %v423 = vpack.c.b16 %v389, %v387
    %v424 = vpack.c.b16 %v390, %v388
    %v425 = vpack.c.b16 %v393, %v391
    %v426 = vpack.c.b16 %v394, %v392
    %459 = vmatprep.subr.bf16.mxu0 %v410
    %460 = vmatpush1.bf16.msra.mxu0 %v409
    %461 = vmatprep.subr.bf16.mxu0 %v408
    %462 = vmatpush1.bf16.msra.mxu0 %v407
    %463 = vmatprep.subr.bf16.mxu0 %v406
    %464 = vmatpush1.bf16.msra.mxu0 %v405
    %465 = vmatprep.subr.bf16.mxu0 %v404
    %466 = vmatpush1.bf16.msra.mxu0 %v403
    %467 = vmatprep.subr.bf16.mxu0 %v402
    %468 = vmatpush1.bf16.msra.mxu0 %v401
    %469 = vmatprep.subr.bf16.mxu0 %v400
    %470 = vmatpush1.bf16.msra.mxu0 %v399
    %471 = vmatprep.subr.bf16.mxu0 %v398
    %472 = vmatpush1.bf16.msra.mxu0 %v397
    %473 = vmatprep.subr.bf16.mxu0 %v396
    %474 = vmatpush1.bf16.msra.mxu0 %v395
    %475 = vmatprep.subr.bf16.mxu0 %v426
    %476 = vmatpush2.bf16.msra.mxu0 %v425
    %477 = vmatprep.subr.bf16.mxu0 %v424
    %478 = vmatpush2.bf16.msra.mxu0 %v423
    %479 = vmatprep.subr.bf16.mxu0 %v422
    %480 = vmatpush2.bf16.msra.mxu0 %v421
    %481 = vmatprep.subr.bf16.mxu0 %v420
    %482 = vmatpush2.bf16.msra.mxu0 %v419
    %483 = vmatprep.subr.bf16.mxu0 %v418
    %484 = vmatpush2.bf16.msra.mxu0 %v417
    %485 = vmatprep.subr.bf16.mxu0 %v416
    %486 = vmatpush2.bf16.msra.mxu0 %v415
    %487 = vmatprep.subr.bf16.mxu0 %v414
    %488 = vmatpush2.bf16.msra.mxu0 %v413
    %489 = vmatprep.subr.bf16.mxu0 %v412
    %490 = vmatpush2.bf16.msra.mxu0 %v411
    %491 = vmatprep.mubr.bf16.mxu0 %v254
    %492 = vmatmul.mubr.bf16.gmra.mxu0 %v253
    %v493 = vpop.f32.mrf.mxu0
    %v494 = vadd.f32 %v292, %v493
    %v495 = vpop.f32.mrf.mxu0
    %v496 = vadd.f32 %v296, %v495
    %v497 = vpop.f32.mrf.mxu0
    %v498 = vpop.f32.mrf.mxu0
    %499 = vdwg.mxu0
    %v500 = vmax.f32 %v494, 0.0
    %v501 = vmax.f32 %v496, 0.0
    %502 = vst [vmem:[%s5] sm:$0xff] %v500
    %503 = vst [vmem:[%s5 + $0x8] sm:$0xff] %v501
    // Predicated region
    $region30: #{dnn_encode.1} parent=1 // pred_check
      _
    $region31: #{dnn_encode.1} parent=1 // pred_check_branch
      %505 = sbr.rel (0) target = $region33
    $region32: #{dnn_encode.1} parent=1 // pred_region
      _
    $region33: #{dnn_encode.1} parent=1 // pred_fallthru
      _
    // Predicated region
    $region34: #{dnn_encode.1} parent=1 // pred_check
      _
    $region35: #{dnn_encode.1} parent=1 // pred_check_branch
      %507 = sbr.rel (0) target = $region37
    $region36: #{dnn_encode.1} parent=1 // pred_region
      _
    $region37: #{dnn_encode.1} parent=1 // pred_fallthru
      _
    %508 = vsyncpa [#allocation3], 1
    %509 = vsyncpa [#allocation5], 1

</llo_original>
